<compile_context>
chip_gen: v5e
topology: v5e:2x2
jax: 0.10.0
libtpu: 0.0.40
codegen_flags: <defaults>
</compile_context>

<pallas_src>
import functools
import math

import jax
import jax.numpy as jnp
from jax import lax
from jax.experimental import pallas as pl
from jax.experimental.pallas import tpu as pltpu


def _dscnn_kernel(x_ref, mean_ref, taps_ref, w_ref, b_ref, out_ref, *,
                  pad, avg_pool, L):
    """One sample-aligned lane tile (C, T) -> (O, T):
    sigmoid -> BN center (scale pre-folded into taps) -> depthwise conv via
    XLU rolls + in-kernel masks -> stride-1 mean pool -> low-rank pointwise
    conv as one MXU matmul with fused bias."""
    C, T = x_ref.shape
    K = taps_ref.shape[1]

    # --- 1. sigmoid (x arrives bf16; elementwise chain in f32 for all gens) ---
    h = jax.nn.sigmoid(x_ref[...].astype(jnp.float32))

    # --- 2. BatchNorm1d centering (rsqrt(var+eps) already folded into taps) ---
    hc = h - mean_ref[...]                                     # (C, T)

    # Per-sample lane positions; the tile is sample-aligned so T % L == 0 and
    # the global (j mod L) equals the local one.
    pos = lax.broadcasted_iota(jnp.int32, (1, T), 1) % L

    # --- 3. depthwise Conv1d via lane rotations + validity masks -------------
    taps = taps_ref[...]                                       # (C, K), BN scale folded in
    acc = hc * taps[:, pad:pad + 1]                            # center tap: no shift/mask
    for k in range(K):                                         # K small & static
        if k == pad:
            continue
        d = k - pad                                            # source offset
        tap = pltpu.roll(hc, shift=(pad - k) % T, axis=1)      # tap[:, j] = hc[:, (j+d) % T]
        valid = (pos >= max(0, -d)) & (pos < L - max(0, d))    # keep window inside sample
        acc = acc + jnp.where(valid, tap, 0.0) * taps[:, k:k + 1]

    # --- 4. AvgPool1d(kernel=avg_pool, stride=1) BEFORE the pointwise conv ---
    # pool(W @ acc) == W @ pool(acc). Wrapped / cross-sample pooled columns are
    # don't-care and excluded by the wrapper's per-sample unfold.
    pooled = acc
    for p in range(1, avg_pool):
        pooled = pooled + pltpu.roll(acc, shift=(T - p) % T, axis=1)
    pooled = pooled * (1.0 / float(avg_pool))

    # --- 5. low-rank pointwise conv: ONE MXU matmul (bf16 ops, f32 acc) ------
    # Depthwise + pointwise biases are fused into b_ref by the wrapper.
    # TODO(synk): torch.nn.Dropout(p=0.1) in training mode is stochastic; it is
    #             applied as identity (eval mode) here.
    y = jnp.dot(w_ref[...], pooled.astype(jnp.bfloat16),
                preferred_element_type=jnp.float32)            # (O, T)
    out_ref[...] = y + b_ref[...]


def dscnn_block_lr_forward(x, params, *, pad=2, avg_pool=2, eps=1e-5,
                           lane_target=512):
    """Pallas forward for DSCNNBlockLR_better (sigmoid/BN/depthwise/LR-pointwise/pool)."""
    N, C, L = x.shape
    dw_w = params["dw_weight"].astype(jnp.float32)             # (C, K)
    dw_b = params["dw_bias"].astype(jnp.float32)               # (C,)
    w1, w2 = params["W1"], params["W2"]
    O = w1.shape[0]
    K = dw_w.shape[1]
    if K != 2 * pad + 1:
        raise ValueError("lane-folded kernel requires a 'same' depthwise conv "
                         "(kernel == 2*pad + 1)")
    if not (1 <= avg_pool <= L):
        raise ValueError("avg_pool must be in [1, L]")

    NL = N * L
    L_out = L - avg_pool + 1            # == (L + 2*pad - K + 1) - avg_pool + 1

    # Parameter-only precompute (XLA, once): full pointwise matrix W1 @ W2 and
    # the depthwise bias folded through pool + pointwise into one output bias.
    w_full = jnp.dot(w1, w2, precision=lax.Precision.HIGHEST)
    b_eff = (params["pw_bias"].astype(jnp.float32)
             + jnp.dot(w_full, dw_b, precision=lax.Precision.HIGHEST)).reshape(O, 1)
    w_bf16 = w_full.astype(jnp.bfloat16)

    # Fold batch into the lane axis; ship the dominant HBM read (x) in bf16.
    x2d = jnp.transpose(x, (1, 0, 2)).reshape(C, NL).astype(jnp.bfloat16)

    # BatchNorm training-mode batch stats hoisted out of the tiled kernel (they
    # are global over the batch): cheap XLA reduction on the same bf16 slab the
    # kernel consumes; centered two-pass biased variance (torch normalization).
    h = jax.nn.sigmoid(x2d.astype(jnp.float32))
    mean = jnp.mean(h, axis=1, keepdims=True)                  # (C, 1)
    var = jnp.mean((h - mean) ** 2, axis=1, keepdims=True)     # (C, 1)
    taps_scaled = dw_w * lax.rsqrt(var + eps)                  # (C, K): BN scale folded in

    # Sample-aligned, 128-multiple lane tiles: TILE = spt * L, with spt a
    # multiple of 128/gcd(L,128) so stores are lane-dense and rotations stay
    # tile-local; sized toward `lane_target` lanes. Batch is zero-padded up to
    # a whole number of tiles (padded columns are discarded by the unfold).
    base = 128 // math.gcd(L, 128)
    spt = base * max(1, min(lane_target // (base * L), -(-N // base)))
    N_pad = -(-N // spt) * spt
    TILE = spt * L
    num_tiles = (N_pad * L) // TILE
    if N_pad > N:
        x2d = jnp.pad(x2d, ((0, 0), (0, (N_pad - N) * L)))

    kern = functools.partial(_dscnn_kernel, pad=pad, avg_pool=avg_pool, L=L)

    def bcast_spec(shape):
        return pl.BlockSpec(shape, lambda i: (0, 0))

    out2d = pl.pallas_call(
        kern,
        out_shape=jax.ShapeDtypeStruct((O, N_pad * L), jnp.float32),
        grid=(num_tiles,),
        in_specs=[pl.BlockSpec((C, TILE), lambda i: (0, i)),   # x tile
                  bcast_spec((C, 1)),                          # BN mean
                  bcast_spec((C, K)),                          # BN-scaled dw taps
                  bcast_spec((O, C)),                          # W1 @ W2 (bf16)
                  bcast_spec((O, 1))],                         # fused bias
        out_specs=pl.BlockSpec((O, TILE), lambda i: (0, i)),
        compiler_params=pltpu.CompilerParams(
            dimension_semantics=("parallel",),
            vmem_limit_bytes=32 * 1024 * 1024),
    )(x2d, mean, taps_scaled, w_bf16, b_eff)

    # Lane-dense (O, N_pad*L) output; unfold with one reshape + slice + transpose.
    return out2d.reshape(O, N_pad, L)[:, :N, :L_out].transpose(1, 0, 2)


def reference_forward(x, params, *, pad=2, avg_pool=2, eps=1e-5):
    """Pure-JAX reference of the same forward pass (HIGHEST precision, f32)."""
    h = jax.nn.sigmoid(x)
    mean = h.mean(axis=(0, 2), keepdims=True)
    var = ((h - mean) ** 2).mean(axis=(0, 2), keepdims=True)
    h = (h - mean) / jnp.sqrt(var + eps)
    hp = jnp.pad(h, ((0, 0), (0, 0), (pad, pad)))
    C, K = params["dw_weight"].shape
    L_dw = x.shape[2] + 2 * pad - K + 1
    acc = sum(hp[:, :, k:k + L_dw] * params["dw_weight"][None, :, k:k + 1]
              for k in range(K)) + params["dw_bias"][None, :, None]
    W = jnp.dot(params["W1"], params["W2"], precision=lax.Precision.HIGHEST)
    y = jnp.einsum("oc,ncl->nol", W, acc,
                   precision=lax.Precision.HIGHEST) + params["pw_bias"][None, :, None]
    L_out = L_dw - avg_pool + 1
    return sum(y[:, :, p:p + L_out] for p in range(avg_pool)) / avg_pool


if __name__ == "__main__":
    # Small deterministic config consistent with the module's __init__.
    N, in_ch, out_ch, L = 2, 8, 16, 16
    kernel_size, rank = 5, 8

    key = jax.random.PRNGKey(0)
    k0, k1, k2, k3, k4, k5 = jax.random.split(key, 6)
    x = jax.random.normal(k0, (N, in_ch, L), jnp.float32)
    params = {
        # depthwise Conv1d weights: (in_ch, in_ch/groups=1, K) stored as (C, K)
        "dw_weight": 0.3 * jax.random.normal(k1, (in_ch, kernel_size), jnp.float32),
        "dw_bias": 0.1 * jax.random.normal(k2, (in_ch,), jnp.float32),
        # LR_pointcnn factors and bias
        "W1": 0.3 * jax.random.normal(k3, (out_ch, rank), jnp.float32),
        "W2": 0.3 * jax.random.normal(k4, (rank, in_ch), jnp.float32),
        "pw_bias": 0.1 * jax.random.normal(k5, (out_ch,), jnp.float32),
    }

    fwd = jax.jit(dscnn_block_lr_forward)
    out = jax.block_until_ready(fwd(x, params))

    ref = reference_forward(x, params)
    assert out.shape == ref.shape, (out.shape, ref.shape)
    # Tolerance: x is shipped to the kernel in bf16 and the MXU operands are
    # bf16 (f32 accumulation), while the reference runs end-to-end in f32 at
    # Precision.HIGHEST -> ~2^-9 operand rounding propagated through the
    # 5-tap depthwise + 8-channel pointwise contractions, hence the gate.
    assert jnp.allclose(out, ref, rtol=1e-2, atol=2e-2), (
        "max abs err = %f" % float(jnp.max(jnp.abs(out - ref))))

    print("KERNEL_OK")
</pallas_src>

<mosaic_0001>
module attributes {stable_mosaic.version = 11 : i64} {
  func.func @_dscnn_kernel(%arg0: i32, %arg1: memref<8x128xbf16, #tpu.memory_space<vmem>>, %arg2: memref<8x1xf32, #tpu.memory_space<vmem>>, %arg3: memref<8x5xf32, #tpu.memory_space<vmem>>, %arg4: memref<16x8xbf16, #tpu.memory_space<vmem>>, %arg5: memref<16x1xf32, #tpu.memory_space<vmem>>, %arg6: memref<16x128xf32, #tpu.memory_space<vmem>>) attributes {dimension_semantics = [#tpu.dimension_semantics<parallel>], iteration_bounds = array<i64: 1>, scalar_prefetch = 0 : i64, scratch_operands = 0 : i64, tpu.core_type = #tpu.core_type<tc>, window_params = [{transform_indices = @transform_0, window_bounds = array<i64: 8, 128>}, {pipeline_mode = #tpu.pipeline_mode<synchronous>, transform_indices = @transform_1, window_bounds = array<i64: 8, 1>}, {pipeline_mode = #tpu.pipeline_mode<synchronous>, transform_indices = @transform_2, window_bounds = array<i64: 8, 5>}, {pipeline_mode = #tpu.pipeline_mode<synchronous>, transform_indices = @transform_3, window_bounds = array<i64: 16, 8>}, {pipeline_mode = #tpu.pipeline_mode<synchronous>, transform_indices = @transform_4, window_bounds = array<i64: 16, 1>}, {transform_indices = @transform_5, window_bounds = array<i64: 16, 128>}]} {
    %c0 = arith.constant 0 : index
    %c0_0 = arith.constant 0 : index
    %0 = vector.load %arg1[%c0, %c0_0] : memref<8x128xbf16, #tpu.memory_space<vmem>>, vector<8x128xbf16>
    %1 = arith.extf %0 : vector<8x128xbf16> to vector<8x128xf32>
    %2 = arith.negf %1 : vector<8x128xf32>
    %3 = math.exp %2 : vector<8x128xf32>
    %cst = arith.constant 1.000000e+00 : f32
    %4 = vector.broadcast %cst : f32 to vector<8x128xf32>
    %5 = arith.addf %4, %3 : vector<8x128xf32>
    %6 = arith.divf %4, %5 : vector<8x128xf32>
    %c0_1 = arith.constant 0 : index
    %c0_2 = arith.constant 0 : index
    %7 = vector.load %arg2[%c0_1, %c0_2] : memref<8x1xf32, #tpu.memory_space<vmem>>, vector<8x1xf32>
    %8 = vector.broadcast %7 : vector<8x1xf32> to vector<8x128xf32>
    %9 = arith.subf %6, %8 : vector<8x128xf32>
    %10 = tpu.iota {dimensions = array<i32: 1>} : vector<1x128xi32>
    %c16_i32 = arith.constant 16 : i32
    %c0_i32 = arith.constant 0 : i32
    %11 = arith.cmpi eq, %c16_i32, %c0_i32 : i32
    %c1_i32 = arith.constant 1 : i32
    %12 = arith.select %11, %c1_i32, %c16_i32 : i32
    %13 = vector.broadcast %12 : i32 to vector<1x128xi32>
    %14 = arith.remsi %10, %13 : vector<1x128xi32>
    %c0_i32_3 = arith.constant 0 : i32
    %15 = vector.broadcast %c0_i32_3 : i32 to vector<1x128xi32>
    %16 = arith.cmpi ne, %14, %15 : vector<1x128xi32>
    %c0_i32_4 = arith.constant 0 : i32
    %17 = vector.broadcast %c0_i32_4 : i32 to vector<1x128xi32>
    %18 = arith.cmpi slt, %14, %17 : vector<1x128xi32>
    %c0_i32_5 = arith.constant 0 : i32
    %19 = arith.cmpi slt, %12, %c0_i32_5 : i32
    %20 = vector.broadcast %19 : i1 to vector<1x128xi1>
    %21 = vector.broadcast %20 : vector<1x128xi1> to vector<1x128xi1>
    %22 = arith.xori %18, %21 : vector<1x128xi1>
    %23 = arith.andi %22, %16 : vector<1x128xi1>
    %24 = vector.broadcast %12 : i32 to vector<1x128xi32>
    %25 = arith.addi %14, %24 : vector<1x128xi32>
    %26 = arith.select %23, %25, %14 : vector<1x128xi1>, vector<1x128xi32>
    %c0_6 = arith.constant 0 : index
    %c0_7 = arith.constant 0 : index
    %27 = vector.load %arg3[%c0_6, %c0_7] : memref<8x5xf32, #tpu.memory_space<vmem>>, vector<8x5xf32>
    %28 = vector.extract_strided_slice %27 {offsets = [0, 2], sizes = [8, 1], strides = [1, 1]} : vector<8x5xf32> to vector<8x1xf32>
    %29 = vector.broadcast %28 : vector<8x1xf32> to vector<8x128xf32>
    %30 = arith.mulf %9, %29 : vector<8x128xf32>
    %c2_i32 = arith.constant 2 : i32
    %31 = tpu.dynamic_rotate %9 by %c2_i32 dim 1 : vector<8x128xf32>, i32 -> vector<8x128xf32>
    %c2_i32_8 = arith.constant 2 : i32
    %32 = vector.broadcast %c2_i32_8 : i32 to vector<1x128xi32>
    %33 = arith.cmpi sge, %26, %32 : vector<1x128xi32>
    %c16_i32_9 = arith.constant 16 : i32
    %34 = vector.broadcast %c16_i32_9 : i32 to vector<1x128xi32>
    %35 = arith.cmpi slt, %26, %34 : vector<1x128xi32>
    %36 = arith.andi %33, %35 : vector<1x128xi1>
    %cst_10 = arith.constant 0.000000e+00 : f32
    %37 = vector.shape_cast %36 : vector<1x128xi1> to vector<1x128xi1>
    %38 = vector.broadcast %37 : vector<1x128xi1> to vector<8x128xi1>
    %39 = vector.broadcast %cst_10 : f32 to vector<8x128xf32>
    %40 = arith.select %38, %31, %39 : vector<8x128xi1>, vector<8x128xf32>
    %41 = vector.extract_strided_slice %27 {offsets = [0, 0], sizes = [8, 1], strides = [1, 1]} : vector<8x5xf32> to vector<8x1xf32>
    %42 = vector.broadcast %41 : vector<8x1xf32> to vector<8x128xf32>
    %43 = arith.mulf %40, %42 : vector<8x128xf32>
    %44 = arith.addf %30, %43 : vector<8x128xf32>
    %c1_i32_11 = arith.constant 1 : i32
    %45 = tpu.dynamic_rotate %9 by %c1_i32_11 dim 1 : vector<8x128xf32>, i32 -> vector<8x128xf32>
    %c1_i32_12 = arith.constant 1 : i32
    %46 = vector.broadcast %c1_i32_12 : i32 to vector<1x128xi32>
    %47 = arith.cmpi sge, %26, %46 : vector<1x128xi32>
    %c16_i32_13 = arith.constant 16 : i32
    %48 = vector.broadcast %c16_i32_13 : i32 to vector<1x128xi32>
    %49 = arith.cmpi slt, %26, %48 : vector<1x128xi32>
    %50 = arith.andi %47, %49 : vector<1x128xi1>
    %cst_14 = arith.constant 0.000000e+00 : f32
    %51 = vector.shape_cast %50 : vector<1x128xi1> to vector<1x128xi1>
    %52 = vector.broadcast %51 : vector<1x128xi1> to vector<8x128xi1>
    %53 = vector.broadcast %cst_14 : f32 to vector<8x128xf32>
    %54 = arith.select %52, %45, %53 : vector<8x128xi1>, vector<8x128xf32>
    %55 = vector.extract_strided_slice %27 {offsets = [0, 1], sizes = [8, 1], strides = [1, 1]} : vector<8x5xf32> to vector<8x1xf32>
    %56 = vector.broadcast %55 : vector<8x1xf32> to vector<8x128xf32>
    %57 = arith.mulf %54, %56 : vector<8x128xf32>
    %58 = arith.addf %44, %57 : vector<8x128xf32>
    %c127_i32 = arith.constant 127 : i32
    %59 = tpu.dynamic_rotate %9 by %c127_i32 dim 1 : vector<8x128xf32>, i32 -> vector<8x128xf32>
    %c0_i32_15 = arith.constant 0 : i32
    %60 = vector.broadcast %c0_i32_15 : i32 to vector<1x128xi32>
    %61 = arith.cmpi sge, %26, %60 : vector<1x128xi32>
    %c15_i32 = arith.constant 15 : i32
    %62 = vector.broadcast %c15_i32 : i32 to vector<1x128xi32>
    %63 = arith.cmpi slt, %26, %62 : vector<1x128xi32>
    %64 = arith.andi %61, %63 : vector<1x128xi1>
    %cst_16 = arith.constant 0.000000e+00 : f32
    %65 = vector.shape_cast %64 : vector<1x128xi1> to vector<1x128xi1>
    %66 = vector.broadcast %65 : vector<1x128xi1> to vector<8x128xi1>
    %67 = vector.broadcast %cst_16 : f32 to vector<8x128xf32>
    %68 = arith.select %66, %59, %67 : vector<8x128xi1>, vector<8x128xf32>
    %69 = vector.extract_strided_slice %27 {offsets = [0, 3], sizes = [8, 1], strides = [1, 1]} : vector<8x5xf32> to vector<8x1xf32>
    %70 = vector.broadcast %69 : vector<8x1xf32> to vector<8x128xf32>
    %71 = arith.mulf %68, %70 : vector<8x128xf32>
    %72 = arith.addf %58, %71 : vector<8x128xf32>
    %c126_i32 = arith.constant 126 : i32
    %73 = tpu.dynamic_rotate %9 by %c126_i32 dim 1 : vector<8x128xf32>, i32 -> vector<8x128xf32>
    %c0_i32_17 = arith.constant 0 : i32
    %74 = vector.broadcast %c0_i32_17 : i32 to vector<1x128xi32>
    %75 = arith.cmpi sge, %26, %74 : vector<1x128xi32>
    %c14_i32 = arith.constant 14 : i32
    %76 = vector.broadcast %c14_i32 : i32 to vector<1x128xi32>
    %77 = arith.cmpi slt, %26, %76 : vector<1x128xi32>
    %78 = arith.andi %75, %77 : vector<1x128xi1>
    %cst_18 = arith.constant 0.000000e+00 : f32
    %79 = vector.shape_cast %78 : vector<1x128xi1> to vector<1x128xi1>
    %80 = vector.broadcast %79 : vector<1x128xi1> to vector<8x128xi1>
    %81 = vector.broadcast %cst_18 : f32 to vector<8x128xf32>
    %82 = arith.select %80, %73, %81 : vector<8x128xi1>, vector<8x128xf32>
    %83 = vector.extract_strided_slice %27 {offsets = [0, 4], sizes = [8, 1], strides = [1, 1]} : vector<8x5xf32> to vector<8x1xf32>
    %84 = vector.broadcast %83 : vector<8x1xf32> to vector<8x128xf32>
    %85 = arith.mulf %82, %84 : vector<8x128xf32>
    %86 = arith.addf %72, %85 : vector<8x128xf32>
    %c127_i32_19 = arith.constant 127 : i32
    %87 = tpu.dynamic_rotate %86 by %c127_i32_19 dim 1 : vector<8x128xf32>, i32 -> vector<8x128xf32>
    %88 = arith.addf %86, %87 : vector<8x128xf32>
    %cst_20 = arith.constant 5.000000e-01 : f32
    %89 = vector.broadcast %cst_20 : f32 to vector<8x128xf32>
    %90 = arith.mulf %88, %89 : vector<8x128xf32>
    %c0_21 = arith.constant 0 : index
    %c0_22 = arith.constant 0 : index
    %91 = vector.load %arg4[%c0_21, %c0_22] : memref<16x8xbf16, #tpu.memory_space<vmem>>, vector<16x8xbf16>
    %92 = arith.truncf %90 : vector<8x128xf32> to vector<8x128xbf16>
    %cst_23 = arith.constant dense<0.000000e+00> : vector<16x128xf32>
    %93 = tpu.matmul %91, %92, %cst_23 {dimension_numbers = #tpu.dot_dimension_numbers<[1], [0], [0], [1], [0, 0, 1, 1], [], []>} : vector<16x8xbf16>, vector<8x128xbf16>, vector<16x128xf32> -> vector<16x128xf32>
    %c0_24 = arith.constant 0 : index
    %c0_25 = arith.constant 0 : index
    %94 = vector.load %arg5[%c0_24, %c0_25] : memref<16x1xf32, #tpu.memory_space<vmem>>, vector<16x1xf32>
    %95 = vector.broadcast %94 : vector<16x1xf32> to vector<16x128xf32>
    %96 = arith.addf %93, %95 : vector<16x128xf32>
    %c0_26 = arith.constant 0 : index
    %c0_27 = arith.constant 0 : index
    %97 = vector.load %arg6[%c0_26, %c0_27] : memref<16x128xf32, #tpu.memory_space<vmem>>, vector<16x128xf32>
    tpu.vector_store %arg6[%c0_26, %c0_27], %96 {strides = array<i32>} : memref<16x128xf32, #tpu.memory_space<vmem>>, vector<16x128xf32>,
    return
  }
  func.func @transform_0(%arg0: i32) -> (i32, i32) {
    %c0_i32 = arith.constant 0 : i32
    %c0_i32_0 = arith.constant 0 : i32
    return %c0_i32, %arg0 : i32, i32
  }
  func.func @transform_1(%arg0: i32) -> (i32, i32) {
    %c0_i32 = arith.constant 0 : i32
    %c0_i32_0 = arith.constant 0 : i32
    %c0_i32_1 = arith.constant 0 : i32
    return %c0_i32, %c0_i32_0 : i32, i32
  }
  func.func @transform_2(%arg0: i32) -> (i32, i32) {
    %c0_i32 = arith.constant 0 : i32
    %c0_i32_0 = arith.constant 0 : i32
    %c0_i32_1 = arith.constant 0 : i32
    return %c0_i32, %c0_i32_0 : i32, i32
  }
  func.func @transform_3(%arg0: i32) -> (i32, i32) {
    %c0_i32 = arith.constant 0 : i32
    %c0_i32_0 = arith.constant 0 : i32
    %c0_i32_1 = arith.constant 0 : i32
    return %c0_i32, %c0_i32_0 : i32, i32
  }
  func.func @transform_4(%arg0: i32) -> (i32, i32) {
    %c0_i32 = arith.constant 0 : i32
    %c0_i32_0 = arith.constant 0 : i32
    %c0_i32_1 = arith.constant 0 : i32
    return %c0_i32, %c0_i32_0 : i32, i32
  }
  func.func @transform_5(%arg0: i32) -> (i32, i32) {
    %c0_i32 = arith.constant 0 : i32
    %c0_i32_0 = arith.constant 0 : i32
    return %c0_i32, %arg0 : i32, i32
  }
}

</mosaic_0001>

<llo_original>
// kernel: dscnn_block_lr_forward.1
$region0: #{dscnn_block_lr_forward.1}
  #allocation0 [shape = 'u32[]', space=smem, size = 0x4, offset = 0x4, fixed_abs, tag = 'smem constant byte address 0x4 - core index']
  #allocation1 [shape = 'u32[72,128]{1,0:T(1,128)}', space=vmem, size = 0x9000, scoped, tag = 'internal scratch']
  %s0 = inlined_call_operand.vmem [shape: bf16[8,128], index: 0, kind: input, shape index: {}]
  %s1 = inlined_call_operand.vmem [shape: f32[8,1], index: 1, kind: input, shape index: {}]
  %s2 = inlined_call_operand.vmem [shape: f32[8,5], index: 2, kind: input, shape index: {}]
  %s3 = inlined_call_operand.vmem [shape: bf16[16,8], index: 3, kind: input, shape index: {}]
  %s4 = inlined_call_operand.vmem [shape: f32[16,1], index: 4, kind: input, shape index: {}]
  %s5 = inlined_call_operand.vmem [shape: f32[16,128], index: 5, kind: output, shape index: {}]
  %s6 = sld [smem:[#allocation0]]
  $region30: #{dscnn_block_lr_forward.1} parent=0
    _
  %s8 = ssub.s32 1, %s6
  %s9 = scalar_select 0, %s8, %s6
  // Predicated region
  $region2: #{dscnn_block_lr_forward.1} parent=0 // pred_check
    _
  $region3: #{dscnn_block_lr_forward.1} parent=0 // pred_check_branch
    %11 = sbr.rel (0) target = $region5
  $region4: #{dscnn_block_lr_forward.1} parent=0 // pred_region
    _
  $region5: #{dscnn_block_lr_forward.1} parent=0 // pred_fallthru
    _
  // Predicated region
  $region6: #{dscnn_block_lr_forward.1} parent=0 // pred_check
    _
  $region7: #{dscnn_block_lr_forward.1} parent=0 // pred_check_branch
    %13 = sbr.rel (0) target = $region9
  $region8: #{dscnn_block_lr_forward.1} parent=0 // pred_region
    _
  $region9: #{dscnn_block_lr_forward.1} parent=0 // pred_fallthru
    _
  // Predicated region
  $region10: #{dscnn_block_lr_forward.1} parent=0 // pred_check
    _
  $region11: #{dscnn_block_lr_forward.1} parent=0 // pred_check_branch
    %15 = sbr.rel (0) target = $region13
  $region12: #{dscnn_block_lr_forward.1} parent=0 // pred_region
    _
  $region13: #{dscnn_block_lr_forward.1} parent=0 // pred_fallthru
    _
  // Predicated region
  $region14: #{dscnn_block_lr_forward.1} parent=0 // pred_check
    _
  $region15: #{dscnn_block_lr_forward.1} parent=0 // pred_check_branch
    %17 = sbr.rel (0) target = $region17
  $region16: #{dscnn_block_lr_forward.1} parent=0 // pred_region
    _
  $region17: #{dscnn_block_lr_forward.1} parent=0 // pred_fallthru
    _
  // Predicated region
  $region18: #{dscnn_block_lr_forward.1} parent=0 // pred_check
    _
  $region19: #{dscnn_block_lr_forward.1} parent=0 // pred_check_branch
    %19 = sbr.rel (0) target = $region21
  $region20: #{dscnn_block_lr_forward.1} parent=0 // pred_region
    _
  $region21: #{dscnn_block_lr_forward.1} parent=0 // pred_fallthru
    _
  %v21 = vld [vmem:[%s0] sm:$0xf]
  %v22 = vunpack.c.l.bf16 %v21
  %v23 = vxor.u32 %v22, 2147483648
  %v24 = vmul.f32 %v23, 1.442695
  %v25 = vpow.pop %v24
  %v26 = vadd.f32 %v25, 1.0
  %v27 = vrcp.pop %v26
  %v28 = vmul.f32 %v26, %v27
  %v29 = vsub.f32 1.0, %v28
  %v30 = vmul.f32 %v27, %v29
  %v31 = vadd.f32 %v27, %v30
  %vm32 = vweird.f32 %v26
  %vm33 = vweird.f32 %v27
  %vm34 = vmor %vm32, %vm33
  %v35 = vsel %vm34, %v27, %v31
  %v36 = vand.u32 2147483647, %v26
  %vm37 = vcmp.eq.f32.partialorder %v36, 8.507059e+37
  %v38 = vand.u32 %v26, 2147483648
  %v39 = vor.u32 1.1754944e-38, %v38
  %v40 = vsel %vm37, %v39, %v35
  %v41 = vmul.f32 1.0, %v40
  %v42 = vld [vmem:[%s1] sm:$0xff]
  %44 = vset.pattern.permute.xlu0 0
  %45 = vperm.xlu0 %44, %v42
  %v46 = vpop.permute.xlu0 %45
  %v48 = vsub.f32 %v41, %v46
  %v49 = vlaneseq
  %v50 = vand.u32 %v49, 127
  %vm51 = vcmp.lt.s32.totalorder %v50, 0
  %v52 = vsub.s32 0, %v50
  %v53 = vsel %vm51, %v52, %v50
  %v54 = vshrl.u32 %v53, 4
  %v55 = vand.u32 %v53, 15
  %v56 = vsub.s32 0, %v55
  %v57 = vsel %vm51, %v56, %v55
  %vm58 = vcmp.ne.s32.totalorder %v57, 0
  %vm59 = vcmp.lt.s32.totalorder %v57, 0
  %vm60 = vmand %vm59, %vm58
  %v61 = vadd.s32 %v57, 16
  %v62 = vsel %vm60, %v61, %v57
  %v63 = vld [vmem:[%s2] sm:$0xff]
  %65 = vset.pattern.permute.xlu0 2
  %66 = vperm.xlu0 %65, %v63
  %v67 = vpop.permute.xlu0 %66
  %v69 = vmul.f32 %v48, %v67
  %70 = vrot.lane.b32.xlu0 %v48, 2
  %v71 = vpop.permute.xlu0 %70
  %vm72 = vcmp.ge.s32.totalorder %v62, 2
  %vm73 = vcmp.lt.s32.totalorder %v62, 16
  %vm74 = vmand %vm72, %vm73
  %v75 = vsel %vm74, 1, 0
  %vm76 = vcmp.eq.s32.totalorder %v75, 1
  %v77 = vsel %vm76, %v71, 0.0
  %78 = vset.pattern.permute.xlu0 0
  %79 = vperm.xlu0 %78, %v63
  %v80 = vpop.permute.xlu0 %79
  %v82 = vmul.f32 %v77, %v80
  %v83 = vadd.f32 %v69, %v82
  %84 = vrot.lane.b32.xlu0 %v48, 1
  %v85 = vpop.permute.xlu0 %84
  %vm86 = vcmp.ge.s32.totalorder %v62, 1
  %vm87 = vmand %vm86, %vm73
  %v88 = vsel %vm87, 1, 0
  %vm89 = vcmp.eq.s32.totalorder %v88, 1
  %v90 = vsel %vm89, %v85, 0.0
  %91 = vset.pattern.permute.xlu0 1
  %92 = vperm.xlu0 %91, %v63
  %v93 = vpop.permute.xlu0 %92
  %v95 = vmul.f32 %v90, %v93
  %v96 = vadd.f32 %v83, %v95
  %97 = vrot.lane.b32.xlu0 %v48, 127
  %v98 = vpop.permute.xlu0 %97
  %vm99 = vcmp.ge.s32.totalorder %v62, 0
  %vm100 = vcmp.lt.s32.totalorder %v62, 15
  %vm101 = vmand %vm99, %vm100
  %v102 = vsel %vm101, 1, 0
  %vm103 = vcmp.eq.s32.totalorder %v102, 1
  %v104 = vsel %vm103, %v98, 0.0
  %105 = vset.pattern.permute.xlu0 3
  %106 = vperm.xlu0 %105, %v63
  %v107 = vpop.permute.xlu0 %106
  %v109 = vmul.f32 %v104, %v107
  %v110 = vadd.f32 %v96, %v109
  %111 = vrot.lane.b32.xlu0 %v48, 126
  %v112 = vpop.permute.xlu0 %111
  %vm113 = vcmp.lt.s32.totalorder %v62, 14
  %vm114 = vmand %vm99, %vm113
  %v115 = vsel %vm114, 1, 0
  %vm116 = vcmp.eq.s32.totalorder %v115, 1
  %v117 = vsel %vm116, %v112, 0.0
  %118 = vset.pattern.permute.xlu0 4
  %119 = vperm.xlu0 %118, %v63
  %v120 = vpop.permute.xlu0 %119
  %v122 = vmul.f32 %v117, %v120
  %v123 = vadd.f32 %v110, %v122
  %124 = vrot.lane.b32.xlu0 %v123, 127
  %v125 = vpop.permute.xlu0 %124
  %v126 = vadd.f32 %v123, %v125
  %v127 = vmul.f32 %v126, 0.5
  %v128 = vld [vmem:[%s3] sm:$0xf]
  %v129 = vld [vmem:[%s3 + $0x4] sm:$0xf]
  %v130 = vpack.c.bf16 %v127, %v127
  %v131 = vld [vmem:[%s4] sm:$0xff]
  %v132 = vld [vmem:[%s4 + $0x8] sm:$0xff]
  %134 = vset.pattern.permute.xlu0 0
  %135 = vperm.xlu0 %134, %v131
  %v136 = vpop.permute.xlu0 %135
  %139 = vset.pattern.permute.xlu0 0
  %140 = vperm.xlu0 %139, %v132
  %v141 = vpop.permute.xlu0 %140
  %v145 = vunpack.c.l.b16 %v128
  %v146 = vunpack.c.l.b16 %v129
  %v147 = vpack.c.b16 %v146, %v145
  %vm148 = vcmask 64512
  %v150 = vsel %vm148, %v147, 0
  %vm152 = vcmask 1043456
  %v154 = vsel %vm152, %v130, 0
  %156 = vmatpush.bf16.msra.mxu0 0
  %157 = vmatpush.bf16.msra.mxu0 0
  %158 = vmatpush.bf16.msra.mxu0 0
  %159 = vmatpush.bf16.msra.mxu0 0
  %160 = vmatpush.bf16.msra.mxu0 0
  %161 = vmatpush.bf16.msra.mxu0 0
  %162 = vmatpush.bf16.msra.mxu0 0
  %163 = vmatpush.bf16.msra.mxu0 %v154
  %164 = vmatmul.bf16.gmra.mxu0 %v150
  %v165 = vpop.f32.mrf.mxu0
  %v166 = vadd.f32 %v136, %v165
  %v167 = vpop.f32.mrf.mxu0
  %v168 = vadd.f32 %v141, %v167
  %169 = vdwg.mxu0
  %170 = vst [vmem:[%s5] sm:$0xff] %v166
  %171 = vst [vmem:[%s5 + $0x8] sm:$0xff] %v168
  // Predicated region
  $region22: #{dscnn_block_lr_forward.1} parent=0 // pred_check
    _
  $region23: #{dscnn_block_lr_forward.1} parent=0 // pred_check_branch
    %173 = sbr.rel (0) target = $region25
  $region24: #{dscnn_block_lr_forward.1} parent=0 // pred_region
    _
  $region25: #{dscnn_block_lr_forward.1} parent=0 // pred_fallthru
    _
  // Predicated region
  $region26: #{dscnn_block_lr_forward.1} parent=0 // pred_check
    _
  $region27: #{dscnn_block_lr_forward.1} parent=0 // pred_check_branch
    %175 = sbr.rel (0) target = $region29
  $region28: #{dscnn_block_lr_forward.1} parent=0 // pred_region
    _
  $region29: #{dscnn_block_lr_forward.1} parent=0 // pred_fallthru
    _

</llo_original>
